<compile_context>
chip_gen: v7x
topology: tpu7x:2x2x1
jax: 0.10.0
libtpu: 0.0.40
codegen_flags: <defaults>
</compile_context>

<pallas_src>
import math

import jax
import jax.numpy as jnp
from jax.experimental import pallas as pl
from jax.experimental.pallas import tpu as pltpu


_LANE = 128
_SUBLANE = 8


# ---------------------------------------------------------------------------
# Helpers
# ---------------------------------------------------------------------------

def _vmem_budget_bytes():
    """Generation-aware scoped-VMEM budget (v7x ~32 MiB, v5e/v6e ~64 MiB)."""
    try:
        cap = int(pltpu.get_tpu_info().vmem_capacity_bytes)
    except Exception:
        cap = 64 * 1024 * 1024          # conservative (v7x-sized) fallback
    return min(cap // 2, 64 * 1024 * 1024)


def _round_up(v, m):
    return ((v + m - 1) // m) * m


def _pick_tile(dim, mult, cap):
    """Largest multiple of `mult` that divides `dim`, capped at `cap`.
    Falls back to the full dim (always a legal Pallas block)."""
    t = (cap // mult) * mult
    while t >= mult:
        if dim % t == 0:
            return t
        t -= mult
    return dim


# ---------------------------------------------------------------------------
# Fused small-K path (grid over B-tiles only, weight resident in VMEM)
# ---------------------------------------------------------------------------

def _make_fused_kernel(K, L, J, Kw, Kb, packed_x, per_k_store, compute_dtype,
                       has_bias):
    def kernel(*refs):
        if has_bias:
            x_ref, w_ref, b_ref, o_ref = refs
        else:
            x_ref, w_ref, o_ref = refs
            b_ref = None
        outs = []
        for k in range(K):                               # unrolled, K is small
            if packed_x:
                xk = x_ref[:, k * L:(k + 1) * L]         # lane-aligned slice
            else:
                xk = x_ref[:, k, :]                      # (L not a 128-multiple)
            if compute_dtype is not None:
                xk = xk.astype(compute_dtype)            # VPU cast, free slot
            wk = w_ref[k if Kw > 1 else 0]               # (L, J)
            acc = jnp.dot(xk, wk, preferred_element_type=jnp.float32)
            if has_bias:
                acc = acc + b_ref[k if Kb > 1 else 0].astype(jnp.float32)
            if per_k_store:
                # lane-aligned unmasked store; short accumulator live range.
                o_ref[:, k * J:(k + 1) * J] = acc.astype(o_ref.dtype)
            else:
                outs.append(acc)
        if not per_k_store:
            o_ref[...] = jnp.concatenate(outs, axis=-1).astype(o_ref.dtype)
    return kernel


def _fused_tb(B, K, L, J, Kw, Kb, xb, wb, ob, fit_bytes):
    """Pick the B-tile; None if even the smallest tile doesn't fit VMEM."""
    fixed = 2 * (Kw * L * J + Kb * J) * wb               # dbl-buffered weight/bias
    per_row = 2 * K * L * xb + 2 * K * J * ob + K * J * 4
    cands = sorted({B} | {m for m in (512, 256, 128, 64, 32, 16, 8)
                          if m < B and B % m == 0}, reverse=True)
    fitting = [c for c in cands if fixed + c * per_row <= fit_bytes]
    if not fitting:
        return None
    # Prefer >=2 grid steps so v7x's two TensorCores both get work.
    multi = [c for c in fitting if B // c >= 2]
    return multi[0] if multi else fitting[0]


def _parallel_linear_fused(x, weight, bias_k1j, tb, out_dtype, compute_dtype,
                           vmem_limit):
    B, K, L = x.shape
    Kw, _, J = weight.shape
    has_bias = bias_k1j is not None
    Kb = bias_k1j.shape[0] if has_bias else 0
    packed_x = (L % _LANE == 0)
    per_k_store = (J % _LANE == 0)

    if packed_x:
        x_in = x.reshape(B, K * L)                       # free contiguous reshape
        x_spec = pl.BlockSpec((tb, K * L), lambda i: (i, 0))
    else:
        x_in = x
        x_spec = pl.BlockSpec((tb, K, L), lambda i: (i, 0, 0))

    in_specs = [
        x_spec,
        # Constant block index -> weight DMA'd once and kept resident
        # (covers share=True without materializing K copies in HBM).
        pl.BlockSpec((Kw, L, J), lambda i: (0, 0, 0)),
    ]
    operands = [x_in, weight]
    if has_bias:
        in_specs.append(pl.BlockSpec((Kb, 1, J), lambda i: (0, 0, 0)))
        operands.append(bias_k1j)

    kernel = _make_fused_kernel(K, L, J, Kw, Kb, packed_x, per_k_store,
                                compute_dtype, has_bias)

    out = pl.pallas_call(
        kernel,
        out_shape=jax.ShapeDtypeStruct((B, K * J), out_dtype),
        grid=(B // tb,),
        in_specs=in_specs,
        # Packed output (B, K*J): lane-dense stores; (B, K, J) view is free.
        out_specs=pl.BlockSpec((tb, K * J), lambda i: (i, 0)),
        compiler_params=pltpu.CompilerParams(
            dimension_semantics=("parallel",),
            vmem_limit_bytes=int(vmem_limit)),
    )(*operands)
    return out.reshape(B, K, J)


# ---------------------------------------------------------------------------
# Tiled path for large shapes (no HBM transposes; packed (B,K*L)/(B,K*J))
# ---------------------------------------------------------------------------

def _make_tiled_kernel(has_bias, compute_dtype):
    def kernel(*refs):
        if has_bias:
            x_ref, w_ref, b_ref, o_ref, acc_ref = refs
        else:
            x_ref, w_ref, o_ref, acc_ref = refs
            b_ref = None

        @pl.when(pl.program_id(3) == 0)
        def _():
            acc_ref[...] = jnp.zeros_like(acc_ref)

        xt = x_ref[...]
        if compute_dtype is not None:
            xt = xt.astype(compute_dtype)                # VPU cast, free slot
        acc_ref[...] += jnp.dot(xt, w_ref[...],
                                preferred_element_type=jnp.float32)

        @pl.when(pl.program_id(3) == pl.num_programs(3) - 1)
        def _():
            res = acc_ref[...]
            if has_bias:
                res = res + b_ref[...].astype(jnp.float32)
            o_ref[...] = res.astype(o_ref.dtype)
    return kernel


def _parallel_linear_tiled(x, weight, bias_k1j, out_dtype, compute_dtype,
                           budget):
    B, K, L = x.shape
    Kw, _, J = weight.shape
    has_bias = bias_k1j is not None

    # Pad L / J to lane multiples so every tile is (8,128)-aligned and every
    # output store is an unmasked lane-dense vst.
    # TODO(synk): the pad (and the trailing J slice) costs an extra HBM pass;
    # it is only taken when L or J is not already a 128-multiple.
    L_p, J_p = _round_up(L, _LANE), _round_up(J, _LANE)
    if L_p != L:
        x = jnp.pad(x, ((0, 0), (0, 0), (0, L_p - L)))
        weight = jnp.pad(weight, ((0, 0), (0, L_p - L), (0, 0)))
    if J_p != J:
        weight = jnp.pad(weight, ((0, 0), (0, 0), (0, J_p - J)))
        if has_bias:
            bias_k1j = jnp.pad(bias_k1j, ((0, 0), (0, 0), (0, J_p - J)))

    xb = jnp.dtype(x.dtype).itemsize
    wb = jnp.dtype(weight.dtype).itemsize
    ob = jnp.dtype(out_dtype).itemsize
    fit = (budget * 3) // 4

    tm = _pick_tile(B, _SUBLANE, 512)
    tn = _pick_tile(J_p, _LANE, 512)
    tk = _pick_tile(L_p, _LANE, 2048)

    def est(m, n, kk):
        return (2 * m * kk * xb + 2 * kk * n * wb + 2 * m * n * ob
                + m * n * 4 + 2 * n * 4)

    # Shrink (reduction tile first) until the double-buffered set fits.
    while (est(tm, tn, tk) > fit and tk > _LANE
           and (tk // 2) % _LANE == 0 and L_p % (tk // 2) == 0):
        tk //= 2
    while (est(tm, tn, tk) > fit and tn > _LANE
           and (tn // 2) % _LANE == 0 and J_p % (tn // 2) == 0):
        tn //= 2
    while (est(tm, tn, tk) > fit and tm > _SUBLANE
           and (tm // 2) % _SUBLANE == 0 and B % (tm // 2) == 0):
        tm //= 2

    # x / out presented as free contiguous reshapes (no HBM transpose);
    # k is folded into the column block index.
    x_p = x.reshape(B, K * L_p)
    n_l, n_j = L_p // tk, J_p // tn
    grid = (K, B // tm, n_j, n_l)                        # reduction axis last

    in_specs = [
        pl.BlockSpec((tm, tk), lambda k, i, j, l: (i, k * n_l + l)),
        pl.BlockSpec((pl.Squeezed(), tk, tn),
                     (lambda k, i, j, l: (k, l, j)) if Kw > 1
                     else (lambda k, i, j, l: (0, l, j))),
    ]
    operands = [x_p, weight]
    if has_bias:
        Kb = bias_k1j.shape[0]
        in_specs.append(
            pl.BlockSpec((pl.Squeezed(), 1, tn),
                         (lambda k, i, j, l: (k, 0, j)) if Kb > 1
                         else (lambda k, i, j, l: (0, 0, j))))
        operands.append(bias_k1j)

    out = pl.pallas_call(
        _make_tiled_kernel(has_bias, compute_dtype),
        out_shape=jax.ShapeDtypeStruct((B, K * J_p), out_dtype),
        grid=grid,
        in_specs=in_specs,
        out_specs=pl.BlockSpec((tm, tn), lambda k, i, j, l: (i, k * n_j + j)),
        scratch_shapes=[pltpu.VMEM((tm, tn), jnp.float32)],
        compiler_params=pltpu.CompilerParams(
            dimension_semantics=("parallel", "parallel", "parallel",
                                 "arbitrary"),
            vmem_limit_bytes=int(budget)),
    )(*operands)

    out = out.reshape(B, K, J_p)
    if J_p != J:
        out = out[..., :J]
    return out


# ---------------------------------------------------------------------------
# Dispatch + public wrapper
# ---------------------------------------------------------------------------

def _dispatch(x, weight, bias_k1j, out_dtype, compute_dtype, budget):
    B, K, L = x.shape
    Kw, _, J = weight.shape
    Kb = bias_k1j.shape[0] if bias_k1j is not None else 0

    # Pre-cast only the small, reused weight; x is cast inside the kernel so
    # no extra un-hidden HBM pass over x is added.
    if compute_dtype is not None and weight.dtype != compute_dtype:
        weight = weight.astype(compute_dtype)

    xb = jnp.dtype(x.dtype).itemsize
    wb = jnp.dtype(weight.dtype).itemsize
    ob = jnp.dtype(out_dtype).itemsize

    if K <= 16:
        tb = _fused_tb(B, K, L, J, Kw, Kb, xb, wb, ob, (budget * 3) // 4)
        if tb is not None:
            return _parallel_linear_fused(x, weight, bias_k1j, tb, out_dtype,
                                          compute_dtype, budget)
    return _parallel_linear_tiled(x, weight, bias_k1j, out_dtype,
                                  compute_dtype, budget)


def parallel_linear(x, weight, bias=None, *, share=False, compute_dtype=None):
    """ParallelLinear forward: out = einsum('bkl,klj->bkj', x, W) + bias.

    x: (B, K, L); weight: (K, L, J) or (1, L, J) (share); bias: (1, K, J),
    (1, 1, J) (share) or None.  Sharing is inferred from leading dims, so the
    shared weight/bias are never materialized K times in HBM.
    """
    del share                                            # inferred from shapes
    B, K, L = x.shape
    Kw, Lw, J = weight.shape
    assert Lw == L and Kw in (1, K)
    out_dtype = x.dtype
    budget = _vmem_budget_bytes()

    if bias is not None:
        Kb = bias.shape[1]
        assert bias.shape == (1, Kb, J) and Kb in (1, K)
        bias_k1j = jnp.reshape(bias, (Kb, 1, J))         # contiguous -> free
    else:
        Kb = 0
        bias_k1j = None

    # share fast path: fold K into the batch -> one big (B*K, L) x (L, J)
    # matmul (much better MXU M-utilization, no per-k weight re-stream).
    if Kw == 1 and Kb <= 1:
        out = _dispatch(x.reshape(B * K, 1, L), weight, bias_k1j,
                        out_dtype, compute_dtype, budget)
        return out.reshape(B, K, J)

    return _dispatch(x, weight, bias_k1j, out_dtype, compute_dtype, budget)


def init_parallel_linear_params(key, n_parallel, in_feat, out_feat,
                                share=False, bias=True, dtype=jnp.float32):
    """Mirrors ParallelLinear.__init__ + reset_parameters (kaiming_uniform with
    a=sqrt(5) on weight[n].T -> Uniform(-1/sqrt(in_feat), 1/sqrt(in_feat));
    bias init to 0)."""
    n_w = 1 if share else n_parallel
    bound = 1.0 / math.sqrt(in_feat)
    w = jax.random.uniform(key, (n_w, in_feat, out_feat),
                           minval=-bound, maxval=bound, dtype=dtype)
    b = (jnp.zeros((1, 1 if share else n_parallel, out_feat), dtype=dtype)
         if bias else None)
    return w, b


if __name__ == "__main__":
    key = jax.random.PRNGKey(0)
    ks = jax.random.split(key, 12)

    # --- Test 1: fused path, per-head weights, bias, non-128 L/J ------------
    B, K, L, J = 8, 4, 32, 32
    x = jax.random.normal(ks[0], (B, K, L), dtype=jnp.float32)
    w = jax.random.uniform(ks[1], (K, L, J), minval=-1 / math.sqrt(L),
                           maxval=1 / math.sqrt(L), dtype=jnp.float32)
    b = jax.random.normal(ks[2], (1, K, J), dtype=jnp.float32) * 0.1
    out = jax.block_until_ready(parallel_linear(x, w, b))
    ref = jnp.einsum("bkl,klj->bkj", x, w) + b
    assert out.shape == (B, K, J)
    assert jnp.allclose(out, ref, atol=1e-4, rtol=1e-4), "test1 mismatch"

    # --- Test 2: share=True fast path (K folded into batch), no bias --------
    w_sh = jax.random.uniform(ks[3], (1, L, J), minval=-1 / math.sqrt(L),
                              maxval=1 / math.sqrt(L), dtype=jnp.float32)
    out_sh = jax.block_until_ready(parallel_linear(x, w_sh, None, share=True))
    ref_sh = jnp.einsum("bkl,klj->bkj", x, jnp.broadcast_to(w_sh, (K, L, J)))
    assert jnp.allclose(out_sh, ref_sh, atol=1e-4, rtol=1e-4), "test2 mismatch"

    # --- Test 3: tiled path (K > 16), multi-step f32 reduction over L -------
    B2, K2, L2, J2 = 32, 18, 2176, 128        # L2 = 17*128 -> 17 reduction steps
    x2 = jax.random.normal(ks[4], (B2, K2, L2), dtype=jnp.float32)
    w2 = jax.random.uniform(ks[5], (K2, L2, J2), minval=-1 / math.sqrt(L2),
                            maxval=1 / math.sqrt(L2), dtype=jnp.float32)
    b2 = jax.random.normal(ks[6], (1, K2, J2), dtype=jnp.float32) * 0.1
    out2 = jax.block_until_ready(parallel_linear(x2, w2, b2))
    ref2 = jnp.einsum("bkl,klj->bkj", x2, w2) + b2
    assert out2.shape == (B2, K2, J2)
    assert jnp.allclose(out2, ref2, atol=2e-2, rtol=2e-2), "test3 mismatch"

    # --- Test 4: fused path, packed x + per-k lane stores, bf16 compute -----
    B3, K3, L3, J3 = 16, 4, 128, 128
    x3 = jax.random.normal(ks[7], (B3, K3, L3), dtype=jnp.float32)
    w3 = jax.random.uniform(ks[8], (K3, L3, J3), minval=-1 / math.sqrt(L3),
                            maxval=1 / math.sqrt(L3), dtype=jnp.float32)
    b3 = jnp.zeros((1, K3, J3), dtype=jnp.float32)
    out3 = jax.block_until_ready(
        parallel_linear(x3, w3, b3, compute_dtype=jnp.bfloat16))
    ref3 = jnp.einsum("bkl,klj->bkj",
                      x3.astype(jnp.bfloat16).astype(jnp.float32),
                      w3.astype(jnp.bfloat16).astype(jnp.float32)) + b3
    assert jnp.allclose(out3, ref3, atol=3e-2, rtol=3e-2), "test4 mismatch"

    # --- Test 5: tiled path with L/J padding (non-128 shapes), bias ---------
    B4, K4, L4, J4 = 32, 20, 100, 72
    x4 = jax.random.normal(ks[9], (B4, K4, L4), dtype=jnp.float32)
    w4 = jax.random.uniform(ks[10], (K4, L4, J4), minval=-1 / math.sqrt(L4),
                            maxval=1 / math.sqrt(L4), dtype=jnp.float32)
    b4 = jax.random.normal(ks[11], (1, K4, J4), dtype=jnp.float32) * 0.1
    out4 = jax.block_until_ready(parallel_linear(x4, w4, b4))
    ref4 = jnp.einsum("bkl,klj->bkj", x4, w4) + b4
    assert out4.shape == (B4, K4, J4)
    assert jnp.allclose(out4, ref4, atol=5e-3, rtol=5e-3), "test5 mismatch"

    print("KERNEL_OK")
</pallas_src>

<mosaic_0001>
module attributes {stable_mosaic.version = 11 : i64} {
  func.func @kernel(%arg0: i32, %arg1: memref<8x4x32xf32, #tpu.memory_space<vmem>>, %arg2: memref<4x32x32xf32, #tpu.memory_space<vmem>>, %arg3: memref<4x1x32xf32, #tpu.memory_space<vmem>>, %arg4: memref<8x128xf32, #tpu.memory_space<vmem>>) attributes {dimension_semantics = [#tpu.dimension_semantics<parallel>], iteration_bounds = array<i64: 1>, scalar_prefetch = 0 : i64, scratch_operands = 0 : i64, tpu.core_type = #tpu.core_type<tc>, window_params = [{transform_indices = @transform_0, window_bounds = array<i64: 8, 4, 32>}, {pipeline_mode = #tpu.pipeline_mode<synchronous>, transform_indices = @transform_1, window_bounds = array<i64: 4, 32, 32>}, {pipeline_mode = #tpu.pipeline_mode<synchronous>, transform_indices = @transform_2, window_bounds = array<i64: 4, 1, 32>}, {transform_indices = @transform_3, window_bounds = array<i64: 8, 128>}]} {
    %c0 = arith.constant 0 : index
    %c0_0 = arith.constant 0 : index
    %c0_1 = arith.constant 0 : index
    %0 = vector.load %arg1[%c0, %c0_0, %c0_1] : memref<8x4x32xf32, #tpu.memory_space<vmem>>, vector<8x1x32xf32>
    %1 = vector.shape_cast %0 : vector<8x1x32xf32> to vector<8x32xf32>
    %c0_2 = arith.constant 0 : index
    %c0_3 = arith.constant 0 : index
    %c0_4 = arith.constant 0 : index
    %2 = vector.load %arg2[%c0_2, %c0_3, %c0_4] : memref<4x32x32xf32, #tpu.memory_space<vmem>>, vector<1x32x32xf32>
    %3 = vector.shape_cast %2 : vector<1x32x32xf32> to vector<32x32xf32>
    %cst = arith.constant dense<0.000000e+00> : vector<8x32xf32>
    %4 = tpu.matmul %1, %3, %cst {dimension_numbers = #tpu.dot_dimension_numbers<[1], [0], [0], [1], [0, 0, 1, 1], [], []>} : vector<8x32xf32>, vector<32x32xf32>, vector<8x32xf32> -> vector<8x32xf32>
    %c0_5 = arith.constant 0 : index
    %c0_6 = arith.constant 0 : index
    %c0_7 = arith.constant 0 : index
    %5 = vector.load %arg3[%c0_5, %c0_6, %c0_7] : memref<4x1x32xf32, #tpu.memory_space<vmem>>, vector<1x1x32xf32>
    %6 = vector.shape_cast %5 : vector<1x1x32xf32> to vector<1x32xf32>
    %7 = vector.broadcast %6 : vector<1x32xf32> to vector<8x32xf32>
    %8 = arith.addf %4, %7 : vector<8x32xf32>
    %c0_8 = arith.constant 0 : index
    %c1 = arith.constant 1 : index
    %c0_9 = arith.constant 0 : index
    %9 = vector.load %arg1[%c0_8, %c1, %c0_9] : memref<8x4x32xf32, #tpu.memory_space<vmem>>, vector<8x1x32xf32>
    %10 = vector.shape_cast %9 : vector<8x1x32xf32> to vector<8x32xf32>
    %c1_10 = arith.constant 1 : index
    %c0_11 = arith.constant 0 : index
    %c0_12 = arith.constant 0 : index
    %11 = vector.load %arg2[%c1_10, %c0_11, %c0_12] : memref<4x32x32xf32, #tpu.memory_space<vmem>>, vector<1x32x32xf32>
    %12 = vector.shape_cast %11 : vector<1x32x32xf32> to vector<32x32xf32>
    %cst_13 = arith.constant dense<0.000000e+00> : vector<8x32xf32>
    %13 = tpu.matmul %10, %12, %cst_13 {dimension_numbers = #tpu.dot_dimension_numbers<[1], [0], [0], [1], [0, 0, 1, 1], [], []>} : vector<8x32xf32>, vector<32x32xf32>, vector<8x32xf32> -> vector<8x32xf32>
    %c1_14 = arith.constant 1 : index
    %c0_15 = arith.constant 0 : index
    %c0_16 = arith.constant 0 : index
    %14 = vector.load %arg3[%c1_14, %c0_15, %c0_16] : memref<4x1x32xf32, #tpu.memory_space<vmem>>, vector<1x1x32xf32>
    %15 = vector.shape_cast %14 : vector<1x1x32xf32> to vector<1x32xf32>
    %16 = vector.broadcast %15 : vector<1x32xf32> to vector<8x32xf32>
    %17 = arith.addf %13, %16 : vector<8x32xf32>
    %c0_17 = arith.constant 0 : index
    %c2 = arith.constant 2 : index
    %c0_18 = arith.constant 0 : index
    %18 = vector.load %arg1[%c0_17, %c2, %c0_18] : memref<8x4x32xf32, #tpu.memory_space<vmem>>, vector<8x1x32xf32>
    %19 = vector.shape_cast %18 : vector<8x1x32xf32> to vector<8x32xf32>
    %c2_19 = arith.constant 2 : index
    %c0_20 = arith.constant 0 : index
    %c0_21 = arith.constant 0 : index
    %20 = vector.load %arg2[%c2_19, %c0_20, %c0_21] : memref<4x32x32xf32, #tpu.memory_space<vmem>>, vector<1x32x32xf32>
    %21 = vector.shape_cast %20 : vector<1x32x32xf32> to vector<32x32xf32>
    %cst_22 = arith.constant dense<0.000000e+00> : vector<8x32xf32>
    %22 = tpu.matmul %19, %21, %cst_22 {dimension_numbers = #tpu.dot_dimension_numbers<[1], [0], [0], [1], [0, 0, 1, 1], [], []>} : vector<8x32xf32>, vector<32x32xf32>, vector<8x32xf32> -> vector<8x32xf32>
    %c2_23 = arith.constant 2 : index
    %c0_24 = arith.constant 0 : index
    %c0_25 = arith.constant 0 : index
    %23 = vector.load %arg3[%c2_23, %c0_24, %c0_25] : memref<4x1x32xf32, #tpu.memory_space<vmem>>, vector<1x1x32xf32>
    %24 = vector.shape_cast %23 : vector<1x1x32xf32> to vector<1x32xf32>
    %25 = vector.broadcast %24 : vector<1x32xf32> to vector<8x32xf32>
    %26 = arith.addf %22, %25 : vector<8x32xf32>
    %c0_26 = arith.constant 0 : index
    %c3 = arith.constant 3 : index
    %c0_27 = arith.constant 0 : index
    %27 = vector.load %arg1[%c0_26, %c3, %c0_27] : memref<8x4x32xf32, #tpu.memory_space<vmem>>, vector<8x1x32xf32>
    %28 = vector.shape_cast %27 : vector<8x1x32xf32> to vector<8x32xf32>
    %c3_28 = arith.constant 3 : index
    %c0_29 = arith.constant 0 : index
    %c0_30 = arith.constant 0 : index
    %29 = vector.load %arg2[%c3_28, %c0_29, %c0_30] : memref<4x32x32xf32, #tpu.memory_space<vmem>>, vector<1x32x32xf32>
    %30 = vector.shape_cast %29 : vector<1x32x32xf32> to vector<32x32xf32>
    %cst_31 = arith.constant dense<0.000000e+00> : vector<8x32xf32>
    %31 = tpu.matmul %28, %30, %cst_31 {dimension_numbers = #tpu.dot_dimension_numbers<[1], [0], [0], [1], [0, 0, 1, 1], [], []>} : vector<8x32xf32>, vector<32x32xf32>, vector<8x32xf32> -> vector<8x32xf32>
    %c3_32 = arith.constant 3 : index
    %c0_33 = arith.constant 0 : index
    %c0_34 = arith.constant 0 : index
    %32 = vector.load %arg3[%c3_32, %c0_33, %c0_34] : memref<4x1x32xf32, #tpu.memory_space<vmem>>, vector<1x1x32xf32>
    %33 = vector.shape_cast %32 : vector<1x1x32xf32> to vector<1x32xf32>
    %34 = vector.broadcast %33 : vector<1x32xf32> to vector<8x32xf32>
    %35 = arith.addf %31, %34 : vector<8x32xf32>
    %36 = tpu.concatenate %8, %17, %26, %35 in 1 : vector<8x32xf32>, vector<8x32xf32>, vector<8x32xf32>, vector<8x32xf32> -> vector<8x128xf32>
    %c0_35 = arith.constant 0 : index
    %c0_36 = arith.constant 0 : index
    %37 = vector.load %arg4[%c0_35, %c0_36] : memref<8x128xf32, #tpu.memory_space<vmem>>, vector<8x128xf32>
    tpu.vector_store %arg4[%c0_35, %c0_36], %36 {strides = array<i32>} : memref<8x128xf32, #tpu.memory_space<vmem>>, vector<8x128xf32>,
    return
  }
  func.func @transform_0(%arg0: i32) -> (i32, i32, i32) {
    %c0_i32 = arith.constant 0 : i32
    %c0_i32_0 = arith.constant 0 : i32
    %c0_i32_1 = arith.constant 0 : i32
    return %arg0, %c0_i32, %c0_i32_0 : i32, i32, i32
  }
  func.func @transform_1(%arg0: i32) -> (i32, i32, i32) {
    %c0_i32 = arith.constant 0 : i32
    %c0_i32_0 = arith.constant 0 : i32
    %c0_i32_1 = arith.constant 0 : i32
    %c0_i32_2 = arith.constant 0 : i32
    return %c0_i32, %c0_i32_0, %c0_i32_1 : i32, i32, i32
  }
  func.func @transform_2(%arg0: i32) -> (i32, i32, i32) {
    %c0_i32 = arith.constant 0 : i32
    %c0_i32_0 = arith.constant 0 : i32
    %c0_i32_1 = arith.constant 0 : i32
    %c0_i32_2 = arith.constant 0 : i32
    return %c0_i32, %c0_i32_0, %c0_i32_1 : i32, i32, i32
  }
  func.func @transform_3(%arg0: i32) -> (i32, i32) {
    %c0_i32 = arith.constant 0 : i32
    %c0_i32_0 = arith.constant 0 : i32
    return %arg0, %c0_i32 : i32, i32
  }
}

</mosaic_0001>

<llo_original>
// kernel: tpu_custom_call.1
$region0: #{tpu_custom_call.1}
  #allocation0 [shape = 'u32[]', space=smem, size = 0x4, offset = 0x4, fixed_abs, tag = 'smem constant byte address 0x4 - core index']
  #allocation1 [shape = 'u32[144,128]{1,0:T(1,128)}', space=vmem, size = 0x12000, scoped, tag = 'internal scratch']
  %s0 = inlined_call_operand.hbm [shape: f32[8,4,32], index: 0, kind: input, shape index: {}]
  %s1 = inlined_call_operand.hbm [shape: f32[4,32,32], index: 1, kind: input, shape index: {}]
  %s2 = inlined_call_operand.vmem [shape: f32[4,1,32], index: 2, kind: input, shape index: {}]
  %s3 = inlined_call_operand.hbm [shape: f32[8,128], index: 3, kind: output, shape index: {}]
  %s4 = sld [smem:[#allocation0]]
  $region30: #{tpu_custom_call.1} parent=0
    _
  %s6 = ssub.s32 1, %s4
  %s7 = scalar_select 0, %s6, %s4
  $region1: #{tpu_custom_call.1} parent=0
    #allocation2 [shape = 'u8[16384]{0}', space=vmem, size = 0x4000, scoped, tag = 'input window, operand 0, single buffered']
    #allocation3 [shape = 's32[1]{0}', space=sflag, size = 0x4, scoped, tag = 'scoped memory for tpu_custom_call.1']
    #allocation4 [shape = 's32[1]{0}', space=sflag, size = 0x4, scoped, tag = 'scoped memory for tpu_custom_call.1']
    #allocation5 [shape = 'u8[65536]{0}', space=vmem, size = 0x10000, scoped, tag = 'input window, operand 1, single buffered']
    #allocation6 [shape = 's32[1]{0}', space=sflag, size = 0x4, scoped, tag = 'scoped memory for tpu_custom_call.1']
    #allocation7 [shape = 'u8[4096]{0}', space=vmem, size = 0x1000, scoped, tag = 'output window, operand 0, single buffered']
    %8 = vsyncpa [#allocation3], 0
    %9 = vsyncpa [#allocation6], 0
    %10 = vsyncpa [#allocation4], 0
    // Predicated region
    $region2: #{tpu_custom_call.1} parent=1 // pred_check
      _
    $region3: #{tpu_custom_call.1} parent=1 // pred_check_branch
      %12 = sbr.rel (0) target = $region5
    $region4: #{tpu_custom_call.1} parent=1 // pred_region
      %s14 = ssub.s32 512, 512
      %15 = vsyncadd [#allocation3], %s14
      %s16 = sshll.u32 [#allocation2], 4
      %s17 = int_to_ptr.vmem [resolvable:$true] %s16
      %22 = dma.hbm_to_vmem [thread:$0]  %s0, 512, %s17, [#allocation3], 64, 64, 4
    $region5: #{tpu_custom_call.1} parent=1 // pred_fallthru
      _
    // Predicated region
    $region6: #{tpu_custom_call.1} parent=1 // pred_check
      _
    $region7: #{tpu_custom_call.1} parent=1 // pred_check_branch
      %24 = sbr.rel (0) target = $region9
    $region8: #{tpu_custom_call.1} parent=1 // pred_region
      %s26 = ssub.s32 2048, 2048
      %27 = vsyncadd [#allocation6], %s26
      %s28 = sshll.u32 [#allocation5], 4
      %s29 = int_to_ptr.vmem [resolvable:$true] %s28
      %34 = dma.hbm_to_vmem [thread:$0]  %s1, 2048, %s29, [#allocation6], 128, 128, 8
    $region9: #{tpu_custom_call.1} parent=1 // pred_fallthru
      _
    // Predicated region
    $region10: #{tpu_custom_call.1} parent=1 // pred_check
      _
    $region11: #{tpu_custom_call.1} parent=1 // pred_check_branch
      %36 = sbr.rel (0) target = $region13
    $region12: #{tpu_custom_call.1} parent=1 // pred_region
      _
    $region13: #{tpu_custom_call.1} parent=1 // pred_fallthru
      _
    // Predicated region
    $region14: #{tpu_custom_call.1} parent=1 // pred_check
      _
    $region15: #{tpu_custom_call.1} parent=1 // pred_check_branch
      %38 = sbr.rel (0) target = $region17
    $region16: #{tpu_custom_call.1} parent=1 // pred_region
      %39 = dma.done [#allocation3], 512
    $region17: #{tpu_custom_call.1} parent=1 // pred_fallthru
      _
    // Predicated region
    $region18: #{tpu_custom_call.1} parent=1 // pred_check
      _
    $region19: #{tpu_custom_call.1} parent=1 // pred_check_branch
      %41 = sbr.rel (0) target = $region21
    $region20: #{tpu_custom_call.1} parent=1 // pred_region
      %42 = dma.done [#allocation6], 2048
    $region21: #{tpu_custom_call.1} parent=1 // pred_fallthru
      _
    %v43 = vld [vmem:[#allocation2] sm:$0x1]
    %v44 = vld [vmem:[#allocation2 + $0x4] sm:$0x1]
    %v45 = vld [vmem:[#allocation2 + $0x8] sm:$0x1]
    %v46 = vld [vmem:[#allocation2 + $0xc] sm:$0x1]
    %v47 = vld [vmem:[#allocation2 + $0x10] sm:$0x1]
    %v48 = vld [vmem:[#allocation2 + $0x14] sm:$0x1]
    %v49 = vld [vmem:[#allocation2 + $0x18] sm:$0x1]
    %v50 = vld [vmem:[#allocation2 + $0x1c] sm:$0x1]
    %v51 = vld [vmem:[#allocation5] sm:$0xff]
    %v52 = vld [vmem:[#allocation5 + $0x8] sm:$0xff]
    %v53 = vld [vmem:[#allocation5 + $0x10] sm:$0xff]
    %v54 = vld [vmem:[#allocation5 + $0x18] sm:$0xff]
    %v55 = vld [vmem:[%s2] sm:$0x1]
    %v57 = vlaneseq
    %v58 = vshrl.u32 %v57, 7
    %v59 = vsub.s32 0, %v58
    %v60 = vrot.slane %v55, %v59
    %v70 = vrot.slane %v44, 7
    %vm71 = vcmask 1041409
    %v72 = vsel %vm71, %v70, %v43
    %v73 = vrot.slane %v45, 6
    %vm74 = vcmask 1042434
    %v75 = vsel %vm74, %v73, %v72
    %v76 = vrot.slane %v46, 5
    %vm77 = vcmask 1043459
    %v78 = vsel %vm77, %v76, %v75
    %v79 = vrot.slane %v47, 4
    %vm80 = vcmask 1044484
    %v81 = vsel %vm80, %v79, %v78
    %v82 = vrot.slane %v48, 3
    %vm83 = vcmask 1045509
    %v84 = vsel %vm83, %v82, %v81
    %v85 = vrot.slane %v49, 2
    %vm86 = vcmask 1046534
    %v87 = vsel %vm86, %v85, %v84
    %v88 = vrot.slane %v50, 1
    %vm89 = vcmask 1047559
    %v90 = vsel %vm89, %v88, %v87
    %vm91 = vcmask 261120
    %v92 = vsel %vm91, %v90, 0
    %94 = vmatprep.subr.mxu0 0.0
    %95 = vmatpush1.msra.mxu0 %v51
    %96 = vmatprep.subr.mxu0 0.0
    %97 = vmatpush1.msra.mxu0 %v52
    %98 = vmatprep.subr.mxu0 0.0
    %99 = vmatpush1.msra.mxu0 %v53
    %100 = vmatprep.subr.mxu0 0.0
    %101 = vmatpush1.msra.mxu0 %v54
    %102 = vmatprep.subr.mxu0 0.0
    %103 = vmatpush1.msra.mxu0 0.0
    %104 = vmatprep.subr.mxu0 0.0
    %105 = vmatpush1.msra.mxu0 0.0
    %106 = vmatprep.subr.mxu0 0.0
    %107 = vmatpush1.msra.mxu0 0.0
    %108 = vmatprep.subr.mxu0 0.0
    %109 = vmatpush1.msra.mxu0 0.0
    %110 = vmatprep.subr.mxu0 0.0
    %111 = vmatpush1.msra.mxu0 0.0
    %112 = vmatprep.subr.mxu0 0.0
    %113 = vmatpush1.msra.mxu0 0.0
    %114 = vmatprep.subr.mxu0 0.0
    %115 = vmatpush1.msra.mxu0 0.0
    %116 = vmatprep.subr.mxu0 0.0
    %117 = vmatpush1.msra.mxu0 0.0
    %118 = vmatprep.subr.mxu0 0.0
    %119 = vmatpush1.msra.mxu0 0.0
    %120 = vmatprep.subr.mxu0 0.0
    %121 = vmatpush1.msra.mxu0 0.0
    %122 = vmatprep.subr.mxu0 0.0
    %123 = vmatpush1.msra.mxu0 0.0
    %124 = vmatprep.subr.mxu0 0.0
    %125 = vmatpush1.msra.mxu0 0.0
    %126 = vmatprep.subr.mxu0 0.0
    %127 = vmatpush1.msra.mxu0 0.0
    %128 = vmatprep.subr.mxu0 0.0
    %129 = vmatpush1.msra.mxu0 0.0
    %130 = vmatprep.subr.mxu0 0.0
    %131 = vmatpush1.msra.mxu0 0.0
    %132 = vmatprep.subr.mxu0 0.0
    %133 = vmatpush1.msra.mxu0 0.0
    %134 = vmatprep.subr.mxu0 0.0
    %135 = vmatpush1.msra.mxu0 0.0
    %136 = vmatprep.subr.mxu0 0.0
    %137 = vmatpush1.msra.mxu0 0.0
    %138 = vmatprep.subr.mxu0 0.0
    %139 = vmatpush1.msra.mxu0 0.0
    %140 = vmatprep.subr.mxu0 0.0
    %141 = vmatpush1.msra.mxu0 0.0
    %142 = vmatprep.subr.mxu0 0.0
    %143 = vmatpush1.msra.mxu0 0.0
    %144 = vmatprep.subr.mxu0 0.0
    %145 = vmatpush1.msra.mxu0 0.0
    %146 = vmatprep.subr.mxu0 0.0
    %147 = vmatpush1.msra.mxu0 0.0
    %148 = vmatprep.subr.mxu0 0.0
    %149 = vmatpush1.msra.mxu0 0.0
    %150 = vmatprep.subr.mxu0 0.0
    %151 = vmatpush1.msra.mxu0 0.0
    %152 = vmatprep.subr.mxu0 0.0
    %153 = vmatpush1.msra.mxu0 0.0
    %154 = vmatprep.subr.mxu0 0.0
    %155 = vmatpush1.msra.mxu0 0.0
    %156 = vmatprep.subr.mxu0 0.0
    %157 = vmatpush1.msra.mxu0 0.0
    %158 = vmatprep.mubr.f32.mxu0 0.0
    %159 = vmatmul.mubr.f32.gmra.mrb[0].mxu0 %v92
    %v160 = vpop.f32.mrb[0].mxu0
    %v161 = vadd.f32 %v60, %v160
    %v162 = vpop.f32.mrb[0].mxu0
    %163 = vdwg.mxu0
    %v164 = vld [vmem:[#allocation2 + $0x1] sm:$0x1]
    %v165 = vld [vmem:[#allocation2 + $0x5] sm:$0x1]
    %v166 = vld [vmem:[#allocation2 + $0x9] sm:$0x1]
    %v167 = vld [vmem:[#allocation2 + $0xd] sm:$0x1]
    %v168 = vld [vmem:[#allocation2 + $0x11] sm:$0x1]
    %v169 = vld [vmem:[#allocation2 + $0x15] sm:$0x1]
    %v170 = vld [vmem:[#allocation2 + $0x19] sm:$0x1]
    %v171 = vld [vmem:[#allocation2 + $0x1d] sm:$0x1]
    %s172 = scalar_lea.vmem [#allocation5], 32
    %v173 = vld [vmem:[%s172] sm:$0xff]
    %v174 = vld [vmem:[%s172 + $0x8] sm:$0xff]
    %v175 = vld [vmem:[%s172 + $0x10] sm:$0xff]
    %v176 = vld [vmem:[%s172 + $0x18] sm:$0xff]
    %s177 = scalar_lea.vmem %s2, 1
    %v178 = vld [vmem:[%s177] sm:$0x1]
    %v180 = vlaneseq
    %v181 = vshrl.u32 %v180, 7
    %v182 = vsub.s32 0, %v181
    %v183 = vrot.slane %v178, %v182
    %v193 = vrot.slane %v165, 7
    %v194 = vsel %vm71, %v193, %v164
    %v195 = vrot.slane %v166, 6
    %v196 = vsel %vm74, %v195, %v194
    %v197 = vrot.slane %v167, 5
    %v198 = vsel %vm77, %v197, %v196
    %v199 = vrot.slane %v168, 4
    %v200 = vsel %vm80, %v199, %v198
    %v201 = vrot.slane %v169, 3
    %v202 = vsel %vm83, %v201, %v200
    %v203 = vrot.slane %v170, 2
    %v204 = vsel %vm86, %v203, %v202
    %v205 = vrot.slane %v171, 1
    %v206 = vsel %vm89, %v205, %v204
    %v207 = vsel %vm91, %v206, 0
    %209 = vmatprep.subr.mxu0 0.0
    %210 = vmatpush1.msra.mxu0 %v173
    %211 = vmatprep.subr.mxu0 0.0
    %212 = vmatpush1.msra.mxu0 %v174
    %213 = vmatprep.subr.mxu0 0.0
    %214 = vmatpush1.msra.mxu0 %v175
    %215 = vmatprep.subr.mxu0 0.0
    %216 = vmatpush1.msra.mxu0 %v176
    %217 = vmatprep.subr.mxu0 0.0
    %218 = vmatpush1.msra.mxu0 0.0
    %219 = vmatprep.subr.mxu0 0.0
    %220 = vmatpush1.msra.mxu0 0.0
    %221 = vmatprep.subr.mxu0 0.0
    %222 = vmatpush1.msra.mxu0 0.0
    %223 = vmatprep.subr.mxu0 0.0
    %224 = vmatpush1.msra.mxu0 0.0
    %225 = vmatprep.subr.mxu0 0.0
    %226 = vmatpush1.msra.mxu0 0.0
    %227 = vmatprep.subr.mxu0 0.0
    %228 = vmatpush1.msra.mxu0 0.0
    %229 = vmatprep.subr.mxu0 0.0
    %230 = vmatpush1.msra.mxu0 0.0
    %231 = vmatprep.subr.mxu0 0.0
    %232 = vmatpush1.msra.mxu0 0.0
    %233 = vmatprep.subr.mxu0 0.0
    %234 = vmatpush1.msra.mxu0 0.0
    %235 = vmatprep.subr.mxu0 0.0
    %236 = vmatpush1.msra.mxu0 0.0
    %237 = vmatprep.subr.mxu0 0.0
    %238 = vmatpush1.msra.mxu0 0.0
    %239 = vmatprep.subr.mxu0 0.0
    %240 = vmatpush1.msra.mxu0 0.0
    %241 = vmatprep.subr.mxu0 0.0
    %242 = vmatpush1.msra.mxu0 0.0
    %243 = vmatprep.subr.mxu0 0.0
    %244 = vmatpush1.msra.mxu0 0.0
    %245 = vmatprep.subr.mxu0 0.0
    %246 = vmatpush1.msra.mxu0 0.0
    %247 = vmatprep.subr.mxu0 0.0
    %248 = vmatpush1.msra.mxu0 0.0
    %249 = vmatprep.subr.mxu0 0.0
    %250 = vmatpush1.msra.mxu0 0.0
    %251 = vmatprep.subr.mxu0 0.0
    %252 = vmatpush1.msra.mxu0 0.0
    %253 = vmatprep.subr.mxu0 0.0
    %254 = vmatpush1.msra.mxu0 0.0
    %255 = vmatprep.subr.mxu0 0.0
    %256 = vmatpush1.msra.mxu0 0.0
    %257 = vmatprep.subr.mxu0 0.0
    %258 = vmatpush1.msra.mxu0 0.0
    %259 = vmatprep.subr.mxu0 0.0
    %260 = vmatpush1.msra.mxu0 0.0
    %261 = vmatprep.subr.mxu0 0.0
    %262 = vmatpush1.msra.mxu0 0.0
    %263 = vmatprep.subr.mxu0 0.0
    %264 = vmatpush1.msra.mxu0 0.0
    %265 = vmatprep.subr.mxu0 0.0
    %266 = vmatpush1.msra.mxu0 0.0
    %267 = vmatprep.subr.mxu0 0.0
    %268 = vmatpush1.msra.mxu0 0.0
    %269 = vmatprep.subr.mxu0 0.0
    %270 = vmatpush1.msra.mxu0 0.0
    %271 = vmatprep.subr.mxu0 0.0
    %272 = vmatpush1.msra.mxu0 0.0
    %273 = vmatprep.mubr.f32.mxu0 0.0
    %274 = vmatmul.mubr.f32.gmra.mrb[0].mxu0 %v207
    %v275 = vpop.f32.mrb[0].mxu0
    %v276 = vadd.f32 %v183, %v275
    %v277 = vpop.f32.mrb[0].mxu0
    %278 = vdwg.mxu0
    %v279 = vld [vmem:[#allocation2 + $0x2] sm:$0x1]
    %v280 = vld [vmem:[#allocation2 + $0x6] sm:$0x1]
    %v281 = vld [vmem:[#allocation2 + $0xa] sm:$0x1]
    %v282 = vld [vmem:[#allocation2 + $0xe] sm:$0x1]
    %v283 = vld [vmem:[#allocation2 + $0x12] sm:$0x1]
    %v284 = vld [vmem:[#allocation2 + $0x16] sm:$0x1]
    %v285 = vld [vmem:[#allocation2 + $0x1a] sm:$0x1]
    %v286 = vld [vmem:[#allocation2 + $0x1e] sm:$0x1]
    %s287 = scalar_lea.vmem [#allocation5], 64
    %v288 = vld [vmem:[%s287] sm:$0xff]
    %v289 = vld [vmem:[%s287 + $0x8] sm:$0xff]
    %v290 = vld [vmem:[%s287 + $0x10] sm:$0xff]
    %v291 = vld [vmem:[%s287 + $0x18] sm:$0xff]
    %s292 = scalar_lea.vmem %s2, 2
    %v293 = vld [vmem:[%s292] sm:$0x1]
    %v295 = vlaneseq
    %v296 = vshrl.u32 %v295, 7
    %v297 = vsub.s32 0, %v296
    %v298 = vrot.slane %v293, %v297
    %v308 = vrot.slane %v280, 7
    %v309 = vsel %vm71, %v308, %v279
    %v310 = vrot.slane %v281, 6
    %v311 = vsel %vm74, %v310, %v309
    %v312 = vrot.slane %v282, 5
    %v313 = vsel %vm77, %v312, %v311
    %v314 = vrot.slane %v283, 4
    %v315 = vsel %vm80, %v314, %v313
    %v316 = vrot.slane %v284, 3
    %v317 = vsel %vm83, %v316, %v315
    %v318 = vrot.slane %v285, 2
    %v319 = vsel %vm86, %v318, %v317
    %v320 = vrot.slane %v286, 1
    %v321 = vsel %vm89, %v320, %v319
    %v322 = vsel %vm91, %v321, 0
    %324 = vmatprep.subr.mxu0 0.0
    %325 = vmatpush1.msra.mxu0 %v288
    %326 = vmatprep.subr.mxu0 0.0
    %327 = vmatpush1.msra.mxu0 %v289
    %328 = vmatprep.subr.mxu0 0.0
    %329 = vmatpush1.msra.mxu0 %v290
    %330 = vmatprep.subr.mxu0 0.0
    %331 = vmatpush1.msra.mxu0 %v291
    %332 = vmatprep.subr.mxu0 0.0
    %333 = vmatpush1.msra.mxu0 0.0
    %334 = vmatprep.subr.mxu0 0.0
    %335 = vmatpush1.msra.mxu0 0.0
    %336 = vmatprep.subr.mxu0 0.0
    %337 = vmatpush1.msra.mxu0 0.0
    %338 = vmatprep.subr.mxu0 0.0
    %339 = vmatpush1.msra.mxu0 0.0
    %340 = vmatprep.subr.mxu0 0.0
    %341 = vmatpush1.msra.mxu0 0.0
    %342 = vmatprep.subr.mxu0 0.0
    %343 = vmatpush1.msra.mxu0 0.0
    %344 = vmatprep.subr.mxu0 0.0
    %345 = vmatpush1.msra.mxu0 0.0
    %346 = vmatprep.subr.mxu0 0.0
    %347 = vmatpush1.msra.mxu0 0.0
    %348 = vmatprep.subr.mxu0 0.0
    %349 = vmatpush1.msra.mxu0 0.0
    %350 = vmatprep.subr.mxu0 0.0
    %351 = vmatpush1.msra.mxu0 0.0
    %352 = vmatprep.subr.mxu0 0.0
    %353 = vmatpush1.msra.mxu0 0.0
    %354 = vmatprep.subr.mxu0 0.0
    %355 = vmatpush1.msra.mxu0 0.0
    %356 = vmatprep.subr.mxu0 0.0
    %357 = vmatpush1.msra.mxu0 0.0
    %358 = vmatprep.subr.mxu0 0.0
    %359 = vmatpush1.msra.mxu0 0.0
    %360 = vmatprep.subr.mxu0 0.0
    %361 = vmatpush1.msra.mxu0 0.0
    %362 = vmatprep.subr.mxu0 0.0
    %363 = vmatpush1.msra.mxu0 0.0
    %364 = vmatprep.subr.mxu0 0.0
    %365 = vmatpush1.msra.mxu0 0.0
    %366 = vmatprep.subr.mxu0 0.0
    %367 = vmatpush1.msra.mxu0 0.0
    %368 = vmatprep.subr.mxu0 0.0
    %369 = vmatpush1.msra.mxu0 0.0
    %370 = vmatprep.subr.mxu0 0.0
    %371 = vmatpush1.msra.mxu0 0.0
    %372 = vmatprep.subr.mxu0 0.0
    %373 = vmatpush1.msra.mxu0 0.0
    %374 = vmatprep.subr.mxu0 0.0
    %375 = vmatpush1.msra.mxu0 0.0
    %376 = vmatprep.subr.mxu0 0.0
    %377 = vmatpush1.msra.mxu0 0.0
    %378 = vmatprep.subr.mxu0 0.0
    %379 = vmatpush1.msra.mxu0 0.0
    %380 = vmatprep.subr.mxu0 0.0
    %381 = vmatpush1.msra.mxu0 0.0
    %382 = vmatprep.subr.mxu0 0.0
    %383 = vmatpush1.msra.mxu0 0.0
    %384 = vmatprep.subr.mxu0 0.0
    %385 = vmatpush1.msra.mxu0 0.0
    %386 = vmatprep.subr.mxu0 0.0
    %387 = vmatpush1.msra.mxu0 0.0
    %388 = vmatprep.mubr.f32.mxu0 0.0
    %389 = vmatmul.mubr.f32.gmra.mrb[0].mxu0 %v322
    %v390 = vpop.f32.mrb[0].mxu0
    %v391 = vadd.f32 %v298, %v390
    %v392 = vpop.f32.mrb[0].mxu0
    %393 = vdwg.mxu0
    %v394 = vld [vmem:[#allocation2 + $0x3] sm:$0x1]
    %v395 = vld [vmem:[#allocation2 + $0x7] sm:$0x1]
    %v396 = vld [vmem:[#allocation2 + $0xb] sm:$0x1]
    %v397 = vld [vmem:[#allocation2 + $0xf] sm:$0x1]
    %v398 = vld [vmem:[#allocation2 + $0x13] sm:$0x1]
    %v399 = vld [vmem:[#allocation2 + $0x17] sm:$0x1]
    %v400 = vld [vmem:[#allocation2 + $0x1b] sm:$0x1]
    %v401 = vld [vmem:[#allocation2 + $0x1f] sm:$0x1]
    %s402 = scalar_lea.vmem [#allocation5], 96
    %v403 = vld [vmem:[%s402] sm:$0xff]
    %v404 = vld [vmem:[%s402 + $0x8] sm:$0xff]
    %v405 = vld [vmem:[%s402 + $0x10] sm:$0xff]
    %v406 = vld [vmem:[%s402 + $0x18] sm:$0xff]
    %s407 = scalar_lea.vmem %s2, 3
    %v408 = vld [vmem:[%s407] sm:$0x1]
    %v410 = vlaneseq
    %v411 = vshrl.u32 %v410, 7
    %v412 = vsub.s32 0, %v411
    %v413 = vrot.slane %v408, %v412
    %v423 = vrot.slane %v395, 7
    %v424 = vsel %vm71, %v423, %v394
    %v425 = vrot.slane %v396, 6
    %v426 = vsel %vm74, %v425, %v424
    %v427 = vrot.slane %v397, 5
    %v428 = vsel %vm77, %v427, %v426
    %v429 = vrot.slane %v398, 4
    %v430 = vsel %vm80, %v429, %v428
    %v431 = vrot.slane %v399, 3
    %v432 = vsel %vm83, %v431, %v430
    %v433 = vrot.slane %v400, 2
    %v434 = vsel %vm86, %v433, %v432
    %v435 = vrot.slane %v401, 1
    %v436 = vsel %vm89, %v435, %v434
    %v437 = vsel %vm91, %v436, 0
    %439 = vmatprep.subr.mxu0 0.0
    %440 = vmatpush1.msra.mxu0 %v403
    %441 = vmatprep.subr.mxu0 0.0
    %442 = vmatpush1.msra.mxu0 %v404
    %443 = vmatprep.subr.mxu0 0.0
    %444 = vmatpush1.msra.mxu0 %v405
    %445 = vmatprep.subr.mxu0 0.0
    %446 = vmatpush1.msra.mxu0 %v406
    %447 = vmatprep.subr.mxu0 0.0
    %448 = vmatpush1.msra.mxu0 0.0
    %449 = vmatprep.subr.mxu0 0.0
    %450 = vmatpush1.msra.mxu0 0.0
    %451 = vmatprep.subr.mxu0 0.0
    %452 = vmatpush1.msra.mxu0 0.0
    %453 = vmatprep.subr.mxu0 0.0
    %454 = vmatpush1.msra.mxu0 0.0
    %455 = vmatprep.subr.mxu0 0.0
    %456 = vmatpush1.msra.mxu0 0.0
    %457 = vmatprep.subr.mxu0 0.0
    %458 = vmatpush1.msra.mxu0 0.0
    %459 = vmatprep.subr.mxu0 0.0
    %460 = vmatpush1.msra.mxu0 0.0
    %461 = vmatprep.subr.mxu0 0.0
    %462 = vmatpush1.msra.mxu0 0.0
    %463 = vmatprep.subr.mxu0 0.0
    %464 = vmatpush1.msra.mxu0 0.0
    %465 = vmatprep.subr.mxu0 0.0
    %466 = vmatpush1.msra.mxu0 0.0
    %467 = vmatprep.subr.mxu0 0.0
    %468 = vmatpush1.msra.mxu0 0.0
    %469 = vmatprep.subr.mxu0 0.0
    %470 = vmatpush1.msra.mxu0 0.0
    %471 = vmatprep.subr.mxu0 0.0
    %472 = vmatpush1.msra.mxu0 0.0
    %473 = vmatprep.subr.mxu0 0.0
    %474 = vmatpush1.msra.mxu0 0.0
    %475 = vmatprep.subr.mxu0 0.0
    %476 = vmatpush1.msra.mxu0 0.0
    %477 = vmatprep.subr.mxu0 0.0
    %478 = vmatpush1.msra.mxu0 0.0
    %479 = vmatprep.subr.mxu0 0.0
    %480 = vmatpush1.msra.mxu0 0.0
    %481 = vmatprep.subr.mxu0 0.0
    %482 = vmatpush1.msra.mxu0 0.0
    %483 = vmatprep.subr.mxu0 0.0
    %484 = vmatpush1.msra.mxu0 0.0
    %485 = vmatprep.subr.mxu0 0.0
    %486 = vmatpush1.msra.mxu0 0.0
    %487 = vmatprep.subr.mxu0 0.0
    %488 = vmatpush1.msra.mxu0 0.0
    %489 = vmatprep.subr.mxu0 0.0
    %490 = vmatpush1.msra.mxu0 0.0
    %491 = vmatprep.subr.mxu0 0.0
    %492 = vmatpush1.msra.mxu0 0.0
    %493 = vmatprep.subr.mxu0 0.0
    %494 = vmatpush1.msra.mxu0 0.0
    %495 = vmatprep.subr.mxu0 0.0
    %496 = vmatpush1.msra.mxu0 0.0
    %497 = vmatprep.subr.mxu0 0.0
    %498 = vmatpush1.msra.mxu0 0.0
    %499 = vmatprep.subr.mxu0 0.0
    %500 = vmatpush1.msra.mxu0 0.0
    %501 = vmatprep.subr.mxu0 0.0
    %502 = vmatpush1.msra.mxu0 0.0
    %503 = vmatprep.mubr.f32.mxu0 0.0
    %504 = vmatmul.mubr.f32.gmra.mrb[0].mxu0 %v437
    %v505 = vpop.f32.mrb[0].mxu0
    %v506 = vadd.f32 %v413, %v505
    %v507 = vpop.f32.mrb[0].mxu0
    %508 = vdwg.mxu0
    %510 = vrot.lane.b32.xlu0 %v276, 32
    %v511 = vpop.permute.xlu0 %510
    %514 = vrot.lane.b32.xlu0 %v391, 64
    %v515 = vpop.permute.xlu0 %514
    %518 = vrot.lane.b32.xlu0 %v506, 96
    %v519 = vpop.permute.xlu0 %518
    %v521 = vsel %vm91, %v161, %v511
    %vm522 = vcmask 523264
    %v523 = vsel %vm522, %v521, %v515
    %vm524 = vcmask 785408
    %v525 = vsel %vm524, %v523, %v519
    %526 = vst [vmem:[#allocation7] sm:$0xff] %v525
    // Predicated region
    $region22: #{tpu_custom_call.1} parent=1 // pred_check
      _
    $region23: #{tpu_custom_call.1} parent=1 // pred_check_branch
      %528 = sbr.rel (0) target = $region25
    $region24: #{tpu_custom_call.1} parent=1 // pred_region
      %s530 = ssub.s32 128, 128
      %531 = vsyncadd [#allocation4], %s530
      %s533 = sshll.u32 [#allocation7], 4
      %s534 = int_to_ptr.vmem [resolvable:$true] %s533
      %536 = dma.vmem_to_hbm [thread:$0]  %s534, 128, %s3, [#allocation4]
    $region25: #{tpu_custom_call.1} parent=1 // pred_fallthru
      _
    // Predicated region
    $region26: #{tpu_custom_call.1} parent=1 // pred_check
      _
    $region27: #{tpu_custom_call.1} parent=1 // pred_check_branch
      %538 = sbr.rel (0) target = $region29
    $region28: #{tpu_custom_call.1} parent=1 // pred_region
      %539 = dma.done [#allocation4], 128
    $region29: #{tpu_custom_call.1} parent=1 // pred_fallthru
      _
    %540 = vsyncpa [#allocation3], 1
    %541 = vsyncpa [#allocation6], 1
    %542 = vsyncpa [#allocation4], 1

</llo_original>
